<compile_context>
chip_gen: v5e
topology: v5e:2x2
jax: 0.10.0
libtpu: 0.0.40
codegen_flags: <defaults>
</compile_context>

<pallas_src>
import math

import jax
import jax.numpy as jnp
from jax.experimental import pallas as pl
from jax.experimental.pallas import tpu as pltpu


def _round_up(a, b):
    return -(-a // b) * b


def _vmem_capacity_bytes():
    """Physical VMEM per TensorCore (generation-aware; conservative fallback)."""
    try:
        cap = getattr(pltpu.get_tpu_info(), "vmem_capacity_bytes", None)
        if cap:
            return int(cap)
    except Exception:
        pass
    return 64 * 2**20  # v7x per-TC size: the safest assumption


def _make_adj_matmul_kernel(add_bias):
    """One output block of  out[g, i, :] = sum_k adj[i, k] @ z[g, k, :] (+ bias).

    Refs (pl.Squeezed() group dim removed):
      adj_ref : (TN, TN)        adjacency tile (row tile i, reduction tile k)
      z_ref   : (TN, LW)        grouped narrow features for reduction tile k
      bias_ref: (1, LW)         grouped bias (only if add_bias)
      o_ref   : (TN, LW)        output tile
      acc_ref : (TN, LW) f32    accumulator scratch
    """

    def kernel(*refs):
        if add_bias:
            adj_ref, z_ref, bias_ref, o_ref, acc_ref = refs
        else:
            adj_ref, z_ref, o_ref, acc_ref = refs
            bias_ref = None

        k = pl.program_id(2)
        prod = jnp.dot(adj_ref[...], z_ref[...],
                       preferred_element_type=jnp.float32)

        # Direct assign on the first reduction step: saves a zero-fill store
        # plus one read-modify-write of the accumulator per output tile.
        @pl.when(k == 0)
        def _assign():
            acc_ref[...] = prod

        @pl.when(k > 0)
        def _accumulate():
            acc_ref[...] += prod

        @pl.when(k == pl.num_programs(2) - 1)
        def _finalize():
            out = acc_ref[...]
            if add_bias:
                out = out + bias_ref[...]
            o_ref[...] = out.astype(o_ref.dtype)

    return kernel


def graph_convolution(x, adjmat, weight, bias=None, *,
                      compute_dtype=jnp.bfloat16, node_tile=None):
    """GCN forward.  x: (B, N, F_in) or (N, F_in); adjmat: (N, N) dense.

    compute_dtype sets the operand dtype of the adjacency contraction
    (bf16 default; accumulation is always f32 via preferred_element_type).
    """
    squeeze = (x.ndim == 2)
    if squeeze:
        x = x[None]
    B, N, F_in = x.shape
    F_out = weight.shape[1]
    out_dtype = x.dtype
    has_bias = bias is not None
    compute_dtype = jnp.dtype(compute_dtype)
    # TODO(synk): optional fp8 (e4m3) adjacency operand on v7x (opt-in, accuracy-dependent).

    # ---- algebraic reorder: always run the O(N^2) adjacency contraction at
    #      min(F_in, F_out) width.  The cheap feature matmul is done once by
    #      XLA in the wrapper, never per row-tile inside the kernel. ----------
    apply_w_first = F_out <= F_in
    f_n = F_out if apply_w_first else F_in
    if apply_w_first:
        z = jnp.einsum("bnf,fo->bno", x, weight,
                       preferred_element_type=jnp.float32)
    else:
        z = x
    z = z.astype(compute_dtype)

    # ---- batch grouping: pack Bt batches along the lane axis so the MXU RHS
    #      and the output store are lane-dense and the adjacency is streamed
    #      from HBM only once per group (traffic ∝ n_groups * N^2). ----------
    max_lanes = 2048
    target_bt = max(1, min(B, max(1, max_lanes // max(f_n, 1))))
    n_groups = -(-B // target_bt)
    Bt = -(-B // n_groups)          # balanced group size -> minimal padding
    Bp = Bt * n_groups
    lw = Bt * f_n                   # kernel lane width

    # ---- generation-aware node tiling (VMEM-budget driven). ----------------
    bpe_c = jnp.dtype(compute_dtype).itemsize
    bpe_o = jnp.dtype(out_dtype).itemsize
    vmem_cap = _vmem_capacity_bytes()
    budget = int(vmem_cap * 0.55)          # working-set target; leave headroom
    lw_pad = _round_up(lw, 128)            # VMEM lane padding

    def est(t):
        tp = _round_up(t, 8)
        return (2 * tp * t * bpe_c          # double-buffered adjacency tiles
                + 2 * tp * lw_pad * bpe_c   # double-buffered z tiles
                + 2 * tp * lw_pad * bpe_o   # double-buffered output tiles
                + tp * lw_pad * 4           # f32 accumulator
                + lw_pad * 4)               # bias

    max_tn = 2048 if bpe_c <= 2 else 1024
    if node_tile is not None:
        max_tn = min(max_tn, int(node_tile))

    if N <= max_tn and est(N) <= budget:
        tn, Np = N, N                       # full-extent blocks, no padding
    else:
        Np = _round_up(N, 128)              # pad to 128, never to tn
        m = Np // 128
        tn = 128
        for d in range(1, m + 1):
            t = 128 * d
            if m % d == 0 and t <= max_tn and est(t) <= budget:
                tn = t
    n_tiles = Np // tn

    # ---- wrapper-side layout plumbing (zero padding + lane-dense slabs). ---
    if Bp > B or Np > N:
        z = jnp.pad(z, ((0, Bp - B), (0, Np - N), (0, 0)))
    zg = (z.reshape(n_groups, Bt, Np, f_n)
            .transpose(0, 2, 1, 3)
            .reshape(n_groups, Np, lw))

    adj_p = adjmat if Np == N else jnp.pad(adjmat, ((0, Np - N), (0, Np - N)))
    adj_p = adj_p.astype(compute_dtype)

    add_bias_in_kernel = has_bias and apply_w_first
    operands = [adj_p, zg]
    in_specs = [
        pl.BlockSpec((tn, tn), lambda g, i, k: (i, k)),                 # adj tile
        pl.BlockSpec((pl.Squeezed(), tn, lw), lambda g, i, k: (g, k, 0)),  # z tile
    ]
    if add_bias_in_kernel:
        bias_g = jnp.tile(bias.astype(jnp.float32).reshape(1, F_out), (1, Bt))
        operands.append(bias_g)
        in_specs.append(pl.BlockSpec((1, lw), lambda g, i, k: (0, 0)))
    out_specs = pl.BlockSpec((pl.Squeezed(), tn, lw), lambda g, i, k: (g, i, 0))

    # ---- explicit VMEM budget from the chosen tiles. ------------------------
    vmem_est = est(tn)
    vmem_limit = int(min(max(2 * vmem_est, 32 * 2**20), int(vmem_cap * 0.7)))
    vmem_limit = max(vmem_limit, vmem_est + (4 * 2**20))

    cost = pl.CostEstimate(
        flops=int(2 * n_groups * Np * Np * lw),
        transcendentals=0,
        bytes_accessed=int(n_groups * (Np * Np * bpe_c
                                       + n_tiles * Np * lw * bpe_c
                                       + Np * lw * bpe_o)),
    )

    out_g = pl.pallas_call(
        _make_adj_matmul_kernel(add_bias_in_kernel),
        out_shape=jax.ShapeDtypeStruct((n_groups, Np, lw), out_dtype),
        grid_spec=pltpu.PrefetchScalarGridSpec(
            num_scalar_prefetch=0,
            grid=(n_groups, n_tiles, n_tiles),   # reduction (k) axis last
            in_specs=in_specs,
            out_specs=out_specs,
            scratch_shapes=[pltpu.VMEM((tn, lw), jnp.float32)],
        ),
        compiler_params=pltpu.CompilerParams(
            dimension_semantics=("parallel", "parallel", "arbitrary"),
            vmem_limit_bytes=vmem_limit,
        ),
        cost_estimate=cost,
    )(*operands)

    # (G, Np, Bt*f_n) -> (B, N, f_n)
    y = (out_g.reshape(n_groups, Np, Bt, f_n)
              .transpose(0, 2, 1, 3)
              .reshape(Bp, Np, f_n))[:B, :N]

    if apply_w_first:
        out = y                                            # bias already added
    else:
        out = jnp.einsum("bnf,fo->bno", y, weight,
                         preferred_element_type=jnp.float32)
        if has_bias:
            out = out + bias
        out = out.astype(out_dtype)

    if squeeze:
        out = out[0]
    return out


if __name__ == "__main__":
    key = jax.random.PRNGKey(0)
    k_x, k_adj, k_w, k_b, k_x2, k_adj2, k_w2 = jax.random.split(key, 7)

    def make_adj(k, n):
        a = jax.random.uniform(k, (n, n), jnp.float32)
        a = (a + a.T) * 0.5 + jnp.eye(n, dtype=jnp.float32)
        return a / jnp.sum(a, axis=1, keepdims=True)

    def ref_gcn(xr, adj, w, b=None):
        out = jnp.einsum("nm,bmf->bnf", adj, jnp.einsum("bni,io->bno", xr, w))
        return out if b is None else out + b

    # --- small case matching the module (B=2, N=16, 8 -> 32), bias present ---
    B, N, F_in, F_out = 2, 16, 8, 32
    stdv = 6.0 / math.sqrt(F_in + F_out)
    weight = jax.random.uniform(k_w, (F_in, F_out), jnp.float32,
                                minval=-stdv, maxval=stdv)
    bias = jax.random.uniform(k_b, (F_out,), jnp.float32,
                              minval=-stdv, maxval=stdv)
    adjmat = make_adj(k_adj, N)
    x = jax.random.normal(k_x, (B, N, F_in), jnp.float32)

    out = jax.block_until_ready(
        graph_convolution(x, adjmat, weight, bias, compute_dtype=jnp.float32))
    ref = ref_gcn(x, adjmat, weight, bias)
    assert out.shape == (B, N, F_out)
    assert jnp.allclose(out, ref, atol=1e-4, rtol=1e-4)

    # --- 2-D (unbatched) path ---
    out2d = jax.block_until_ready(
        graph_convolution(x[0], adjmat, weight, bias, compute_dtype=jnp.float32))
    assert out2d.shape == (N, F_out)
    assert jnp.allclose(out2d, adjmat @ (x[0] @ weight) + bias,
                        atol=1e-4, rtol=1e-4)

    # --- bias=None path ---
    out_nb = jax.block_until_ready(
        graph_convolution(x, adjmat, weight, None, compute_dtype=jnp.float32))
    assert jnp.allclose(out_nb, ref_gcn(x, adjmat, weight, None),
                        atol=1e-4, rtol=1e-4)

    # --- tiled path: node dim tiled with accumulating reduction grid axis ---
    B2, N2 = 3, 256
    adj2 = make_adj(k_adj2, N2)
    x2 = jax.random.normal(k_x2, (B2, N2, F_in), jnp.float32)
    out_t = jax.block_until_ready(
        graph_convolution(x2, adj2, weight, bias,
                          compute_dtype=jnp.float32, node_tile=128))
    ref_t = ref_gcn(x2, adj2, weight, bias)
    assert out_t.shape == (B2, N2, F_out)
    assert jnp.allclose(out_t, ref_t, atol=1e-4, rtol=1e-4)

    # --- reordered path (F_out <= F_in: support precomputed in the wrapper) ---
    F_in2, F_out2 = 32, 8
    w2 = jax.random.uniform(k_w2, (F_in2, F_out2), jnp.float32,
                            minval=-stdv, maxval=stdv)
    x3 = jax.random.normal(k_x2, (B2, N2, F_in2), jnp.float32)
    out_r = jax.block_until_ready(
        graph_convolution(x3, adj2, w2, None,
                          compute_dtype=jnp.float32, node_tile=128))
    assert jnp.allclose(out_r, ref_gcn(x3, adj2, w2, None),
                        atol=1e-4, rtol=1e-4)

    # --- default bf16 adjacency stream (f32 accumulation), looser tolerance ---
    out_bf = jax.block_until_ready(
        graph_convolution(x2, adj2, weight, bias, node_tile=128))
    assert jnp.allclose(out_bf, ref_t, atol=1e-1, rtol=1e-1)

    print("KERNEL_OK")
</pallas_src>

<mosaic_0001>
module attributes {stable_mosaic.version = 11 : i64} {
  func.func @kernel(%arg0: i32, %arg1: i32, %arg2: i32, %arg3: memref<16x16xf32, #tpu.memory_space<vmem>>, %arg4: memref<1x16x16xf32, #tpu.memory_space<vmem>>, %arg5: memref<1x16x16xf32, #tpu.memory_space<vmem>>, %arg6: memref<16x16xf32, #tpu.memory_space<vmem>>) attributes {dimension_semantics = [#tpu.dimension_semantics<parallel>, #tpu.dimension_semantics<parallel>, #tpu.dimension_semantics<arbitrary>], iteration_bounds = array<i64: 1, 1, 1>, scalar_prefetch = 0 : i64, scratch_operands = 1 : i64, tpu.core_type = #tpu.core_type<tc>, window_params = [{transform_indices = @transform_0, window_bounds = array<i64: 16, 16>}, {transform_indices = @transform_1, window_bounds = array<i64: 1, 16, 16>}, {transform_indices = @transform_2, window_bounds = array<i64: 1, 16, 16>}]} {
    %c0 = arith.constant 0 : index
    %c0_0 = arith.constant 0 : index
    %0 = vector.load %arg3[%c0, %c0_0] : memref<16x16xf32, #tpu.memory_space<vmem>>, vector<16x16xf32>
    %c0_1 = arith.constant 0 : index
    %c0_2 = arith.constant 0 : index
    %c0_3 = arith.constant 0 : index
    %1 = vector.load %arg4[%c0_1, %c0_2, %c0_3] : memref<1x16x16xf32, #tpu.memory_space<vmem>>, vector<1x16x16xf32>
    %2 = vector.shape_cast %1 : vector<1x16x16xf32> to vector<16x16xf32>
    %cst = arith.constant dense<0.000000e+00> : vector<16x16xf32>
    %3 = tpu.matmul %0, %2, %cst {dimension_numbers = #tpu.dot_dimension_numbers<[1], [0], [0], [1], [0, 0, 1, 1], [], []>} : vector<16x16xf32>, vector<16x16xf32>, vector<16x16xf32> -> vector<16x16xf32>
    %c0_i32 = arith.constant 0 : i32
    %4 = arith.cmpi eq, %arg2, %c0_i32 : i32
    %5 = arith.extui %4 : i1 to i32
    %c0_i32_4 = arith.constant 0 : i32
    %6 = arith.cmpi ne, %5, %c0_i32_4 : i32
    scf.if %6 {
      %c0_9 = arith.constant 0 : index
      %c0_10 = arith.constant 0 : index
      %13 = vector.load %arg6[%c0_9, %c0_10] : memref<16x16xf32, #tpu.memory_space<vmem>>, vector<16x16xf32>
      tpu.vector_store %arg6[%c0_9, %c0_10], %3 {strides = array<i32>} : memref<16x16xf32, #tpu.memory_space<vmem>>, vector<16x16xf32>,
    } else {
    }
    %c0_i32_5 = arith.constant 0 : i32
    %7 = arith.cmpi sgt, %arg2, %c0_i32_5 : i32
    %8 = arith.extui %7 : i1 to i32
    %c0_i32_6 = arith.constant 0 : i32
    %9 = arith.cmpi ne, %8, %c0_i32_6 : i32
    scf.if %9 {
      %c0_9 = arith.constant 0 : index
      %c0_10 = arith.constant 0 : index
      %13 = vector.load %arg6[%c0_9, %c0_10] : memref<16x16xf32, #tpu.memory_space<vmem>>, vector<16x16xf32>
      %14 = arith.addf %13, %3 : vector<16x16xf32>
      %c0_11 = arith.constant 0 : index
      %c0_12 = arith.constant 0 : index
      %15 = vector.load %arg6[%c0_11, %c0_12] : memref<16x16xf32, #tpu.memory_space<vmem>>, vector<16x16xf32>
      tpu.vector_store %arg6[%c0_11, %c0_12], %14 {strides = array<i32>} : memref<16x16xf32, #tpu.memory_space<vmem>>, vector<16x16xf32>,
    } else {
    }
    %c0_i32_7 = arith.constant 0 : i32
    %10 = arith.cmpi eq, %arg2, %c0_i32_7 : i32
    %11 = arith.extui %10 : i1 to i32
    %c0_i32_8 = arith.constant 0 : i32
    %12 = arith.cmpi ne, %11, %c0_i32_8 : i32
    scf.if %12 {
      %c0_9 = arith.constant 0 : index
      %c0_10 = arith.constant 0 : index
      %13 = vector.load %arg6[%c0_9, %c0_10] : memref<16x16xf32, #tpu.memory_space<vmem>>, vector<16x16xf32>
      %c0_11 = arith.constant 0 : index
      %c0_12 = arith.constant 0 : index
      %c0_13 = arith.constant 0 : index
      %14 = vector.load %arg5[%c0_11, %c0_12, %c0_13] : memref<1x16x16xf32, #tpu.memory_space<vmem>>, vector<1x16x16xf32>
      %15 = vector.shape_cast %14 : vector<1x16x16xf32> to vector<16x16xf32>
      %16 = vector.shape_cast %13 : vector<16x16xf32> to vector<1x16x16xf32>
      tpu.vector_store %arg5[%c0_11, %c0_12, %c0_13], %16 {strides = array<i32>} : memref<1x16x16xf32, #tpu.memory_space<vmem>>, vector<1x16x16xf32>,
    } else {
    }
    return
  }
  func.func @transform_0(%arg0: i32, %arg1: i32, %arg2: i32) -> (i32, i32) {
    %c0_i32 = arith.constant 0 : i32
    return %arg1, %arg2 : i32, i32
  }
  func.func @transform_1(%arg0: i32, %arg1: i32, %arg2: i32) -> (i32, i32, i32) {
    %c0_i32 = arith.constant 0 : i32
    %c0_i32_0 = arith.constant 0 : i32
    return %arg0, %arg2, %c0_i32 : i32, i32, i32
  }
  func.func @transform_2(%arg0: i32, %arg1: i32, %arg2: i32) -> (i32, i32, i32) {
    %c0_i32 = arith.constant 0 : i32
    %c0_i32_0 = arith.constant 0 : i32
    return %arg0, %arg1, %c0_i32 : i32, i32, i32
  }
}

</mosaic_0001>

<llo_original>
// kernel: tpu_custom_call.1
$region0: #{tpu_custom_call.1}
  #allocation0 [shape = 'u32[]', space=smem, size = 0x4, offset = 0x4, fixed_abs, tag = 'smem constant byte address 0x4 - core index']
  #allocation1 [shape = 'u32[72,128]{1,0:T(1,128)}', space=vmem, size = 0x9000, scoped, tag = 'internal scratch']
  #allocation2 [shape = 'f32[16,16]{1,0:T(8,128)}', space=vmem, size = 0x2000, scoped, tag = 'scratch operand']
  %s0 = inlined_call_operand.hbm [shape: f32[16,16], index: 0, kind: input, shape index: {}]
  %s1 = inlined_call_operand.hbm [shape: f32[1,16,16], index: 1, kind: input, shape index: {}]
  %s2 = inlined_call_operand.hbm [shape: f32[1,16,16], index: 2, kind: output, shape index: {}]
  %s3 = sld [smem:[#allocation0]]
  $region38: #{tpu_custom_call.1} parent=0
    _
  %s5 = ssub.s32 1, %s3
  %s6 = scalar_select 0, %s5, %s3
  $region1: #{tpu_custom_call.1} parent=0
    #allocation3 [shape = 'u8[8192]{0}', space=vmem, size = 0x2000, scoped, tag = 'input window, operand 0, single buffered']
    #allocation4 [shape = 's32[1]{0}', space=sflag, size = 0x4, scoped, tag = 'scoped memory for tpu_custom_call.1']
    #allocation5 [shape = 's32[1]{0}', space=sflag, size = 0x4, scoped, tag = 'scoped memory for tpu_custom_call.1']
    #allocation6 [shape = 'u8[8192]{0}', space=vmem, size = 0x2000, scoped, tag = 'input window, operand 1, single buffered']
    #allocation7 [shape = 's32[1]{0}', space=sflag, size = 0x4, scoped, tag = 'scoped memory for tpu_custom_call.1']
    #allocation8 [shape = 'u8[8192]{0}', space=vmem, size = 0x2000, scoped, tag = 'output window, operand 0, single buffered']
    %7 = vsyncpa [#allocation4], 0
    %8 = vsyncpa [#allocation7], 0
    %9 = vsyncpa [#allocation5], 0
    // Predicated region
    $region2: #{tpu_custom_call.1} parent=1 // pred_check
      _
    $region3: #{tpu_custom_call.1} parent=1 // pred_check_branch
      %11 = sbr.rel (0) target = $region5
    $region4: #{tpu_custom_call.1} parent=1 // pred_region
      %13 = vsyncadd [#allocation4], 0
      %s14 = sshll.u32 %s0, 4
      %s15 = int_to_ptr.hbm [resolvable:$true] %s14
      %s16 = sshll.u32 [#allocation3], 4
      %s17 = int_to_ptr.vmem [resolvable:$true] %s16
      %22 = dma.hbm_to_vmem [thread:$0]  %s15, 256, %s17, [#allocation4], 128, 128, 8
    $region5: #{tpu_custom_call.1} parent=1 // pred_fallthru
      _
    // Predicated region
    $region6: #{tpu_custom_call.1} parent=1 // pred_check
      _
    $region7: #{tpu_custom_call.1} parent=1 // pred_check_branch
      %24 = sbr.rel (0) target = $region9
    $region8: #{tpu_custom_call.1} parent=1 // pred_region
      %26 = vsyncadd [#allocation7], 0
      %s27 = sshll.u32 %s1, 4
      %s28 = int_to_ptr.hbm [resolvable:$true] %s27
      %s29 = sshll.u32 [#allocation6], 4
      %s30 = int_to_ptr.vmem [resolvable:$true] %s29
      %35 = dma.hbm_to_vmem [thread:$0]  %s28, 256, %s30, [#allocation7], 128, 128, 8
    $region9: #{tpu_custom_call.1} parent=1 // pred_fallthru
      _
    // Predicated region
    $region10: #{tpu_custom_call.1} parent=1 // pred_check
      _
    $region11: #{tpu_custom_call.1} parent=1 // pred_check_branch
      %37 = sbr.rel (0) target = $region13
    $region12: #{tpu_custom_call.1} parent=1 // pred_region
      %39 = dma.done [#allocation4], 256
    $region13: #{tpu_custom_call.1} parent=1 // pred_fallthru
      _
    // Predicated region
    $region14: #{tpu_custom_call.1} parent=1 // pred_check
      _
    $region15: #{tpu_custom_call.1} parent=1 // pred_check_branch
      %41 = sbr.rel (0) target = $region17
    $region16: #{tpu_custom_call.1} parent=1 // pred_region
      %43 = dma.done [#allocation7], 256
    $region17: #{tpu_custom_call.1} parent=1 // pred_fallthru
      _
    %v44 = vld [vmem:[#allocation3] sm:$0xff]
    %v45 = vld [vmem:[#allocation3 + $0x8] sm:$0xff]
    %v46 = vld [vmem:[#allocation6] sm:$0xff]
    %v47 = vld [vmem:[#allocation6 + $0x8] sm:$0xff]
    %vm48 = vcmask 130048
    %v50 = vsel %vm48, %v44, 0
    %v53 = vsel %vm48, %v45, 0
    %55 = vmatpush.msra.mxu0 0.0
    %56 = vmatpush.msra.mxu0 0.0
    %57 = vmatpush.msra.mxu0 0.0
    %58 = vmatpush.msra.mxu0 0.0
    %59 = vmatpush.msra.mxu0 0.0
    %60 = vmatpush.msra.mxu0 0.0
    %61 = vmatpush.msra.mxu0 0.0
    %62 = vmatpush.msra.mxu0 0.0
    %63 = vmatpush.msra.mxu0 0.0
    %64 = vmatpush.msra.mxu0 0.0
    %65 = vmatpush.msra.mxu0 0.0
    %66 = vmatpush.msra.mxu0 0.0
    %67 = vmatpush.msra.mxu0 0.0
    %68 = vmatpush.msra.mxu0 0.0
    %69 = vmatpush.msra.mxu0 %v47
    %70 = vmatpush.msra.mxu0 %v46
    %71 = vmatmul.f32.gmra.mxu0 %v50
    %v72 = vpop.f32.mrf.mxu0
    %v73 = vadd.f32 0.0, %v72
    %74 = vmatmul.f32.gmra.mxu0 %v53
    %v75 = vpop.f32.mrf.mxu0
    %v76 = vadd.f32 0.0, %v75
    %77 = vdwg.mxu0
    %p78 = scmp.eq.s32.totalorder 0, 0
    // Predicated region
    $region18: #{tpu_custom_call.1} parent=1 // pred_check
      %p79 = pneg %p78
    $region19: #{tpu_custom_call.1} parent=1 // pred_check_branch
      %81 = sbr.rel (%p79) target = $region21
    $region20: #{tpu_custom_call.1} parent=1 // pred_region
      %82 = vst.msk [vmem:[#allocation2] sm:$0xff] %vm48, %v73
      %83 = vst.msk [vmem:[#allocation2 + $0x8] sm:$0xff] %vm48, %v76
    $region21: #{tpu_custom_call.1} parent=1 // pred_fallthru
      _
    %p84 = scmp.gt.s32.totalorder 0, 0
    // Predicated region
    $region22: #{tpu_custom_call.1} parent=1 // pred_check
      %p85 = pneg %p84
    $region23: #{tpu_custom_call.1} parent=1 // pred_check_branch
      %87 = sbr.rel (%p85) target = $region25
    $region24: #{tpu_custom_call.1} parent=1 // pred_region
      %v88 = vld [vmem:[#allocation2] sm:$0xff]
      %v89 = vld [vmem:[#allocation2 + $0x8] sm:$0xff]
      %v90 = vadd.f32 %v88, %v73
      %v91 = vadd.f32 %v89, %v76
      %92 = vst.msk [vmem:[#allocation2] sm:$0xff] %vm48, %v90
      %93 = vst.msk [vmem:[#allocation2 + $0x8] sm:$0xff] %vm48, %v91
    $region25: #{tpu_custom_call.1} parent=1 // pred_fallthru
      _
    // Predicated region
    $region26: #{tpu_custom_call.1} parent=1 // pred_check
      %p94 = pneg %p78
    $region27: #{tpu_custom_call.1} parent=1 // pred_check_branch
      %96 = sbr.rel (%p94) target = $region29
    $region28: #{tpu_custom_call.1} parent=1 // pred_region
      %v97 = vld [vmem:[#allocation2] sm:$0xff]
      %v98 = vld [vmem:[#allocation2 + $0x8] sm:$0xff]
      %99 = vst.msk [vmem:[#allocation8] sm:$0xff] %vm48, %v97
      %100 = vst.msk [vmem:[#allocation8 + $0x8] sm:$0xff] %vm48, %v98
    $region29: #{tpu_custom_call.1} parent=1 // pred_fallthru
      _
    // Predicated region
    $region30: #{tpu_custom_call.1} parent=1 // pred_check
      _
    $region31: #{tpu_custom_call.1} parent=1 // pred_check_branch
      %102 = sbr.rel (0) target = $region33
    $region32: #{tpu_custom_call.1} parent=1 // pred_region
      %104 = vsyncadd [#allocation5], 0
      %s105 = sshll.u32 [#allocation8], 4
      %s106 = int_to_ptr.vmem [resolvable:$true] %s105
      %s107 = sshll.u32 %s2, 4
      %s108 = int_to_ptr.hbm [resolvable:$true] %s107
      %113 = dma.vmem_to_hbm [thread:$0]  %s106, 256, %s108, [#allocation5], 128, 128, 8
    $region33: #{tpu_custom_call.1} parent=1 // pred_fallthru
      _
    // Predicated region
    $region34: #{tpu_custom_call.1} parent=1 // pred_check
      _
    $region35: #{tpu_custom_call.1} parent=1 // pred_check_branch
      %115 = sbr.rel (0) target = $region37
    $region36: #{tpu_custom_call.1} parent=1 // pred_region
      %117 = dma.done [#allocation5], 256
    $region37: #{tpu_custom_call.1} parent=1 // pred_fallthru
      _
    %118 = vsyncpa [#allocation4], 1
    %119 = vsyncpa [#allocation7], 1
    %120 = vsyncpa [#allocation5], 1

</llo_original>
